<compile_context>
chip_gen: v6e
topology: v6e:2x2x1
jax: 0.10.0
libtpu: 0.0.40
codegen_flags: <defaults>
</compile_context>

<pallas_src>
import functools
import math

import jax
import jax.numpy as jnp
from jax import lax
from jax.experimental import pallas as pl
from jax.experimental.pallas import tpu as pltpu

GAMMA = 20.0
LAMBDA1 = 0.1


def _dch_kernel(u_ref, y_ref, rinv_ref, absu_ref, u1_ref, y1_ref, rinv1_ref,
                out_ref, *, k_dim, b_true, b1_true, mask_rows, mask_cols):
    i = pl.program_id(0)
    j = pl.program_id(1)
    tm = u_ref.shape[0]
    tn = u1_ref.shape[0]

    # ---- similarity s = (y @ y1^T > 0); 0/1 labels are exact in bf16 -------
    yy = lax.dot_general(y_ref[...], y1_ref[...], (((1,), (1,)), ((), ())),
                         preferred_element_type=jnp.float32)
    s = (yy > 0.0).astype(jnp.float32)

    # ---- Cauchy distance d(u, u1): one MXU matmul, no per-pair rsqrt -------
    inner = lax.dot_general(u_ref[...], u1_ref[...], (((1,), (1,)), ((), ())),
                            preferred_element_type=jnp.float32)
    cos = jnp.minimum(inner * (rinv_ref[...] * rinv1_ref[...]), 0.99)
    d = (1.0 - cos) * (0.5 * k_dim)

    # s in {0,1}:  s*log(d/g) + log(1+g/d) == log((d+g) * (s ? 1/g : 1/d))
    # -> one log + one approx EUP reciprocal per pair (was rsqrt + 2 logs).
    recip = jnp.where(s > 0.5, jnp.float32(1.0 / GAMMA),
                      pl.reciprocal(d, approx=True))
    t = jnp.log((d + GAMMA) * recip)

    # Validity masks are only generated when B/B1 were padded (static flags).
    if mask_rows or mask_cols:
        valid = jnp.ones((tm, tn), dtype=jnp.bool_)
        if mask_rows:
            ridx = lax.broadcasted_iota(jnp.int32, (tm, tn), 0) + i * tm
            valid = jnp.logical_and(valid, ridx < b_true)
        if mask_cols:
            cidx = lax.broadcasted_iota(jnp.int32, (tm, tn), 1) + j * tn
            valid = jnp.logical_and(valid, cidx < b1_true)
        t = jnp.where(valid, t, 0.0)   # s is already 0 on padded pairs

    s_sum = jnp.sum(s)
    st_sum = jnp.sum(s * t)
    t_sum = jnp.sum(t)

    # Per-row-tile partial sums land in lanes 0..3 of sublane 0 of this
    # tile's output block (accumulated across the j axis, resident in VMEM).
    lane = lax.broadcasted_iota(jnp.int32, (8, 128), 1)
    row = lax.broadcasted_iota(jnp.int32, (8, 128), 0)
    upd = jnp.where(lane == 0, s_sum,
          jnp.where(lane == 1, st_sum,
          jnp.where(lane == 2, t_sum, 0.0)))
    upd = jnp.where(row == 0, upd, 0.0)

    @pl.when(j == 0)
    def _():
        # quantization term: d(|u|, ones) is rank-1 -> per-row column only
        inv_sqrt_k = 1.0 / math.sqrt(k_dim)
        cos_q = jnp.minimum(absu_ref[...] * rinv_ref[...] * inv_sqrt_k, 0.99)
        d_q = (1.0 - cos_q) * (0.5 * k_dim)
        q = jnp.log(1.0 + d_q * (1.0 / GAMMA))            # (tm, 1)
        if mask_rows:
            ridx_c = lax.broadcasted_iota(jnp.int32, (tm, 1), 0) + i * tm
            q = jnp.where(ridx_c < b_true, q, 0.0)
        q_sum = jnp.sum(q)
        qupd = jnp.where(jnp.logical_and(row == 0, lane == 3), q_sum, 0.0)
        out_ref[...] = upd + qupd                          # init + first step

    @pl.when(j > 0)
    def _():
        out_ref[...] = out_ref[...] + upd


def _pick_tile(n, target, align):
    """(tile, padded_n): tile multiple of `align` (or full n when n<=target)."""
    if n <= target:
        return n, n
    max_t = max((target // align) * align, align)
    # Prefer an exact divisor (no padding), largest first.
    for t in range(max_t, align - 1, -align):
        if n % t == 0:
            return t, n
    # Otherwise pad to the aligned tile that wastes the least.
    best_t, best_pad = align, ((n + align - 1) // align) * align
    for t in range(align, max_t + 1, align):
        padded = ((n + t - 1) // t) * t
        if padded <= best_pad:
            best_t, best_pad = t, padded
    return best_t, best_pad


def dch_loss(u, y, u1, y1, *, tm_target=256, tn_target=1024):
    u = jnp.asarray(u, jnp.float32)
    y = jnp.asarray(y, jnp.float32)
    u1 = jnp.asarray(u1, jnp.float32)
    y1 = jnp.asarray(y1, jnp.float32)

    B, K = u.shape
    B1, K1 = u1.shape
    C = y.shape[1]
    assert K1 == K and y.shape[0] == B and y1.shape == (B1, C)

    # Row-side precompute (O(B+B1) XLA work): inverse norms and |u| row sums,
    # so the kernel does zero per-pair rsqrt work and no per-j i-side recompute.
    rinv_u = lax.rsqrt(jnp.maximum(jnp.sum(u * u, axis=1, keepdims=True), 1e-8))
    absu = jnp.sum(jnp.abs(u), axis=1, keepdims=True)
    rinv_u1 = lax.rsqrt(jnp.maximum(jnp.sum(u1 * u1, axis=1), 1e-8)).reshape(1, B1)

    # bf16 operands: halves HBM->VMEM DMA and removes in-kernel casts; all
    # post-matmul elementwise math stays f32 (v5e has no bf16 VPU/EUP).
    u_bf, u1_bf = u.astype(jnp.bfloat16), u1.astype(jnp.bfloat16)
    y_bf, y1_bf = y.astype(jnp.bfloat16), y1.astype(jnp.bfloat16)

    tm, Bp = _pick_tile(B, tm_target, 8)      # sublane-aligned row tile
    tn, B1p = _pick_tile(B1, tn_target, 128)  # lane-dense column tile

    if Bp != B:
        pr = Bp - B
        u_bf = jnp.pad(u_bf, ((0, pr), (0, 0)))
        y_bf = jnp.pad(y_bf, ((0, pr), (0, 0)))
        rinv_u = jnp.pad(rinv_u, ((0, pr), (0, 0)))
        absu = jnp.pad(absu, ((0, pr), (0, 0)))
    if B1p != B1:
        pc = B1p - B1
        u1_bf = jnp.pad(u1_bf, ((0, pc), (0, 0)))
        y1_bf = jnp.pad(y1_bf, ((0, pc), (0, 0)))
        rinv_u1 = jnp.pad(rinv_u1, ((0, 0), (0, pc)))

    grid = (Bp // tm, B1p // tn)

    kernel = functools.partial(
        _dch_kernel, k_dim=K, b_true=B, b1_true=B1,
        mask_rows=(Bp != B), mask_cols=(B1p != B1))

    cost = pl.CostEstimate(
        flops=int(2 * B * B1 * (K + C) + 14 * B * B1),
        transcendentals=int(2 * B * B1 + B),
        bytes_accessed=int(2 * (B * K + B * C + B1 * K + B1 * C)
                           + 4 * (2 * B + B1) + 4 * grid[0] * 8 * 128),
    )

    partials = pl.pallas_call(
        kernel,
        out_shape=jax.ShapeDtypeStruct((grid[0] * 8, 128), jnp.float32),
        grid_spec=pltpu.PrefetchScalarGridSpec(
            num_scalar_prefetch=0,
            grid=grid,
            in_specs=[
                pl.BlockSpec((tm, K), lambda i, j: (i, 0)),   # u   (bf16)
                pl.BlockSpec((tm, C), lambda i, j: (i, 0)),   # y   (bf16)
                pl.BlockSpec((tm, 1), lambda i, j: (i, 0)),   # 1/||u_i||
                pl.BlockSpec((tm, 1), lambda i, j: (i, 0)),   # sum|u_i|
                pl.BlockSpec((tn, K), lambda i, j: (j, 0)),   # u1  (bf16)
                pl.BlockSpec((tn, C), lambda i, j: (j, 0)),   # y1  (bf16)
                pl.BlockSpec((1, tn), lambda i, j: (0, j)),   # 1/||u1_j||
            ],
            out_specs=pl.BlockSpec((8, 128), lambda i, j: (i, 0)),
        ),
        compiler_params=pltpu.CompilerParams(
            # Row tiles are independent -> shard across v7x's 2 TensorCores;
            # the j (reduction) axis stays sequential per row tile.
            dimension_semantics=("parallel", "arbitrary"),
            # Tiles sized so live f32 temps + double buffers fit v7x's 64 MiB.
            vmem_limit_bytes=48 * 1024 * 1024,
        ),
        cost_estimate=cost,
    )(u_bf, y_bf, rinv_u, absu, u1_bf, y1_bf, rinv_u1)

    # ---- epilogue: apply the GLOBAL s-sum weights (tiny jnp reduction) -----
    totals = jnp.sum(partials, axis=0)                 # (128,)
    s_sum, st_sum, t_sum, q_sum = totals[0], totals[1], totals[2], totals[3]
    total_pairs = float(B * B1)
    ns_sum = total_pairs - s_sum
    neg = t_sum - st_sum
    have_both = jnp.logical_and(s_sum > 0.0, ns_sum > 0.0)
    cauchy_mean = jnp.where(
        have_both,
        st_sum / jnp.maximum(s_sum, 1e-12) + neg / jnp.maximum(ns_sum, 1e-12),
        t_sum / total_pairs)
    quant_mean = q_sum / float(B)
    return cauchy_mean + LAMBDA1 * quant_mean


def dch_loss_ref(u, y, u1, y1):
    """Pure-JAX f32 reference matching the PyTorch module semantics."""
    K = u.shape[1]

    def d_fn(hi, hj):
        inner = hi @ hj.T
        ni = jnp.sqrt(jnp.sum(hi ** 2, axis=1, keepdims=True))
        nj = jnp.sqrt(jnp.sum(hj ** 2, axis=1, keepdims=True))
        cos = inner / jnp.maximum(ni * nj.T, 1e-4)
        return (1.0 - jnp.minimum(cos, 0.99)) * K / 2.0

    s = (y @ y1.T > 0).astype(jnp.float32)
    numel = float(s.size)
    s_sum = jnp.sum(s)
    ns_sum = jnp.sum(1.0 - s)
    w = jnp.where(
        jnp.logical_and(s_sum != 0, ns_sum != 0),
        s * numel / jnp.maximum(s_sum, 1e-12)
        + (1.0 - s) * numel / jnp.maximum(ns_sum, 1e-12),
        jnp.ones_like(s))
    d_hij = d_fn(u, u1)
    cauchy = w * (s * jnp.log(d_hij / GAMMA) + jnp.log(1.0 + GAMMA / d_hij))
    quant = jnp.log(1.0 + d_fn(jnp.abs(u), jnp.ones_like(u)) / GAMMA)
    return jnp.mean(cauchy) + LAMBDA1 * jnp.mean(quant)


if __name__ == "__main__":
    B = 8      # config.DATA.TRAIN_BATCHSIZE
    K = 32     # config.MODEL.HEAD.DIM
    C = 8      # number of label classes (multi-hot)

    key = jax.random.PRNGKey(0)
    k_u, k_u1, k_y, k_y1 = jax.random.split(key, 4)

    u = jax.random.normal(k_u, (B, K), dtype=jnp.float32)
    u1 = jax.random.normal(k_u1, (B, K), dtype=jnp.float32)

    # One-hot labels from a small class set so that both similar (s=1) and
    # dissimilar (s=0) pairs exist.
    cls = jax.random.randint(k_y, (B,), 0, 4)
    cls1 = jax.random.randint(k_y1, (B,), 0, 4)
    y = jax.nn.one_hot(cls, C, dtype=jnp.float32)
    y1 = jax.nn.one_hot(cls1, C, dtype=jnp.float32)

    loss = dch_loss(u, y, u1, y1)
    jax.block_until_ready(loss)

    ref = dch_loss_ref(u, y, u1, y1)
    assert jnp.allclose(loss, ref, rtol=1e-2, atol=1e-2), (loss, ref)

    print("KERNEL_OK")
</pallas_src>

<mosaic_0001>
module attributes {stable_mosaic.version = 11 : i64} {
  func.func @_dch_kernel(%arg0: i32, %arg1: i32, %arg2: memref<8x32xbf16, #tpu.memory_space<vmem>>, %arg3: memref<8x8xbf16, #tpu.memory_space<vmem>>, %arg4: memref<8x1xf32, #tpu.memory_space<vmem>>, %arg5: memref<8x1xf32, #tpu.memory_space<vmem>>, %arg6: memref<8x32xbf16, #tpu.memory_space<vmem>>, %arg7: memref<8x8xbf16, #tpu.memory_space<vmem>>, %arg8: memref<1x8xf32, #tpu.memory_space<vmem>>, %arg9: memref<8x128xf32, #tpu.memory_space<vmem>>) attributes {dimension_semantics = [#tpu.dimension_semantics<parallel>, #tpu.dimension_semantics<arbitrary>], iteration_bounds = array<i64: 1, 1>, scalar_prefetch = 0 : i64, scratch_operands = 0 : i64, tpu.core_type = #tpu.core_type<tc>, window_params = [{transform_indices = @transform_0, window_bounds = array<i64: 8, 32>}, {transform_indices = @transform_1, window_bounds = array<i64: 8, 8>}, {transform_indices = @transform_2, window_bounds = array<i64: 8, 1>}, {transform_indices = @transform_3, window_bounds = array<i64: 8, 1>}, {transform_indices = @transform_4, window_bounds = array<i64: 8, 32>}, {transform_indices = @transform_5, window_bounds = array<i64: 8, 8>}, {transform_indices = @transform_6, window_bounds = array<i64: 1, 8>}, {transform_indices = @transform_7, window_bounds = array<i64: 8, 128>}]} {
    %c0 = arith.constant 0 : index
    %c0_0 = arith.constant 0 : index
    %0 = vector.load %arg3[%c0, %c0_0] : memref<8x8xbf16, #tpu.memory_space<vmem>>, vector<8x8xbf16>
    %c0_1 = arith.constant 0 : index
    %c0_2 = arith.constant 0 : index
    %1 = vector.load %arg7[%c0_1, %c0_2] : memref<8x8xbf16, #tpu.memory_space<vmem>>, vector<8x8xbf16>
    %cst = arith.constant dense<0.000000e+00> : vector<8x8xf32>
    %2 = tpu.matmul %0, %1, %cst {dimension_numbers = #tpu.dot_dimension_numbers<[1], [1], [0], [0], [0, 0, 1, 0], [], []>} : vector<8x8xbf16>, vector<8x8xbf16>, vector<8x8xf32> -> vector<8x8xf32>
    %cst_3 = arith.constant 0.000000e+00 : f32
    %3 = vector.broadcast %cst_3 : f32 to vector<8x8xf32>
    %4 = arith.cmpf ogt, %2, %3 : vector<8x8xf32>
    %5 = arith.extui %4 : vector<8x8xi1> to vector<8x8xi32>
    %6 = arith.sitofp %5 : vector<8x8xi32> to vector<8x8xf32>
    %c0_4 = arith.constant 0 : index
    %c0_5 = arith.constant 0 : index
    %7 = vector.load %arg2[%c0_4, %c0_5] : memref<8x32xbf16, #tpu.memory_space<vmem>>, vector<8x32xbf16>
    %c0_6 = arith.constant 0 : index
    %c0_7 = arith.constant 0 : index
    %8 = vector.load %arg6[%c0_6, %c0_7] : memref<8x32xbf16, #tpu.memory_space<vmem>>, vector<8x32xbf16>
    %cst_8 = arith.constant dense<0.000000e+00> : vector<8x8xf32>
    %9 = tpu.matmul %7, %8, %cst_8 {dimension_numbers = #tpu.dot_dimension_numbers<[1], [1], [0], [0], [0, 0, 1, 0], [], []>} : vector<8x32xbf16>, vector<8x32xbf16>, vector<8x8xf32> -> vector<8x8xf32>
    %c0_9 = arith.constant 0 : index
    %c0_10 = arith.constant 0 : index
    %10 = vector.load %arg4[%c0_9, %c0_10] : memref<8x1xf32, #tpu.memory_space<vmem>>, vector<8x1xf32>
    %c0_11 = arith.constant 0 : index
    %c0_12 = arith.constant 0 : index
    %11 = vector.load %arg8[%c0_11, %c0_12] : memref<1x8xf32, #tpu.memory_space<vmem>>, vector<1x8xf32>
    %12 = vector.broadcast %10 : vector<8x1xf32> to vector<8x8xf32>
    %13 = vector.broadcast %11 : vector<1x8xf32> to vector<8x8xf32>
    %14 = arith.mulf %12, %13 : vector<8x8xf32>
    %15 = arith.mulf %9, %14 : vector<8x8xf32>
    %cst_13 = arith.constant 9.900000e-01 : f32
    %16 = vector.broadcast %cst_13 : f32 to vector<8x8xf32>
    %17 = arith.minimumf %15, %16 : vector<8x8xf32>
    %cst_14 = arith.constant 1.000000e+00 : f32
    %18 = vector.broadcast %cst_14 : f32 to vector<8x8xf32>
    %19 = arith.subf %18, %17 : vector<8x8xf32>
    %cst_15 = arith.constant 1.600000e+01 : f32
    %20 = vector.broadcast %cst_15 : f32 to vector<8x8xf32>
    %21 = arith.mulf %19, %20 : vector<8x8xf32>
    %cst_16 = arith.constant 5.000000e-01 : f32
    %22 = vector.broadcast %cst_16 : f32 to vector<8x8xf32>
    %23 = arith.cmpf ogt, %6, %22 : vector<8x8xf32>
    %24 = tpu.reciprocal %21 {approx = true} : vector<8x8xf32> -> vector<8x8xf32>
    %cst_17 = arith.constant 5.000000e-02 : f32
    %25 = vector.broadcast %cst_17 : f32 to vector<8x8xf32>
    %26 = arith.select %23, %25, %24 : vector<8x8xi1>, vector<8x8xf32>
    %cst_18 = arith.constant 2.000000e+01 : f32
    %27 = vector.broadcast %cst_18 : f32 to vector<8x8xf32>
    %28 = arith.addf %21, %27 : vector<8x8xf32>
    %29 = arith.mulf %28, %26 : vector<8x8xf32>
    %30 = math.log %29 : vector<8x8xf32>
    %31 = vector.shape_cast %6 : vector<8x8xf32> to vector<1x8x8xf32>
    %cst_19 = arith.constant dense<0.000000e+00> : vector<1xf32>
    %32 = vector.multi_reduction <add>, %31, %cst_19 [1, 2] : vector<1x8x8xf32> to vector<1xf32>
    %33 = vector.shape_cast %32 : vector<1xf32> to vector<1x1x1xf32>
    %34 = vector.extract %33[0, 0, 0] : f32 from vector<1x1x1xf32>
    %35 = arith.mulf %6, %30 : vector<8x8xf32>
    %36 = vector.shape_cast %35 : vector<8x8xf32> to vector<1x8x8xf32>
    %cst_20 = arith.constant dense<0.000000e+00> : vector<1xf32>
    %37 = vector.multi_reduction <add>, %36, %cst_20 [1, 2] : vector<1x8x8xf32> to vector<1xf32>
    %38 = vector.shape_cast %37 : vector<1xf32> to vector<1x1x1xf32>
    %39 = vector.extract %38[0, 0, 0] : f32 from vector<1x1x1xf32>
    %40 = vector.shape_cast %30 : vector<8x8xf32> to vector<1x8x8xf32>
    %cst_21 = arith.constant dense<0.000000e+00> : vector<1xf32>
    %41 = vector.multi_reduction <add>, %40, %cst_21 [1, 2] : vector<1x8x8xf32> to vector<1xf32>
    %42 = vector.shape_cast %41 : vector<1xf32> to vector<1x1x1xf32>
    %43 = vector.extract %42[0, 0, 0] : f32 from vector<1x1x1xf32>
    %44 = tpu.iota {dimensions = array<i32: 1>} : vector<8x128xi32>
    %45 = tpu.iota {dimensions = array<i32: 0>} : vector<8x128xi32>
    %c0_i32 = arith.constant 0 : i32
    %46 = vector.broadcast %c0_i32 : i32 to vector<8x128xi32>
    %47 = arith.cmpi eq, %44, %46 : vector<8x128xi32>
    %c1_i32 = arith.constant 1 : i32
    %48 = vector.broadcast %c1_i32 : i32 to vector<8x128xi32>
    %49 = arith.cmpi eq, %44, %48 : vector<8x128xi32>
    %c2_i32 = arith.constant 2 : i32
    %50 = vector.broadcast %c2_i32 : i32 to vector<8x128xi32>
    %51 = arith.cmpi eq, %44, %50 : vector<8x128xi32>
    %cst_22 = arith.constant 0.000000e+00 : f32
    %52 = vector.broadcast %43 : f32 to vector<8x128xf32>
    %53 = vector.broadcast %cst_22 : f32 to vector<8x128xf32>
    %54 = arith.select %51, %52, %53 : vector<8x128xi1>, vector<8x128xf32>
    %55 = vector.broadcast %39 : f32 to vector<8x128xf32>
    %56 = arith.select %49, %55, %54 : vector<8x128xi1>, vector<8x128xf32>
    %57 = vector.broadcast %34 : f32 to vector<8x128xf32>
    %58 = arith.select %47, %57, %56 : vector<8x128xi1>, vector<8x128xf32>
    %c0_i32_23 = arith.constant 0 : i32
    %59 = vector.broadcast %c0_i32_23 : i32 to vector<8x128xi32>
    %60 = arith.cmpi eq, %45, %59 : vector<8x128xi32>
    %cst_24 = arith.constant 0.000000e+00 : f32
    %61 = vector.broadcast %cst_24 : f32 to vector<8x128xf32>
    %62 = arith.select %60, %58, %61 : vector<8x128xi1>, vector<8x128xf32>
    %c0_i32_25 = arith.constant 0 : i32
    %63 = arith.cmpi eq, %arg1, %c0_i32_25 : i32
    %64 = arith.extui %63 : i1 to i32
    %c0_i32_26 = arith.constant 0 : i32
    %65 = arith.cmpi ne, %64, %c0_i32_26 : i32
    scf.if %65 {
      %c0_29 = arith.constant 0 : index
      %c0_30 = arith.constant 0 : index
      %69 = vector.load %arg5[%c0_29, %c0_30] : memref<8x1xf32, #tpu.memory_space<vmem>>, vector<8x1xf32>
      %c0_31 = arith.constant 0 : index
      %c0_32 = arith.constant 0 : index
      %70 = vector.load %arg4[%c0_31, %c0_32] : memref<8x1xf32, #tpu.memory_space<vmem>>, vector<8x1xf32>
      %71 = arith.mulf %69, %70 : vector<8x1xf32>
      %cst_33 = arith.constant 0.176776692 : f32
      %72 = vector.broadcast %cst_33 : f32 to vector<8x1xf32>
      %73 = arith.mulf %71, %72 : vector<8x1xf32>
      %cst_34 = arith.constant 9.900000e-01 : f32
      %74 = vector.broadcast %cst_34 : f32 to vector<8x1xf32>
      %75 = arith.minimumf %73, %74 : vector<8x1xf32>
      %cst_35 = arith.constant 1.000000e+00 : f32
      %76 = vector.broadcast %cst_35 : f32 to vector<8x1xf32>
      %77 = arith.subf %76, %75 : vector<8x1xf32>
      %cst_36 = arith.constant 1.600000e+01 : f32
      %78 = vector.broadcast %cst_36 : f32 to vector<8x1xf32>
      %79 = arith.mulf %77, %78 : vector<8x1xf32>
      %cst_37 = arith.constant 5.000000e-02 : f32
      %80 = vector.broadcast %cst_37 : f32 to vector<8x1xf32>
      %81 = arith.mulf %79, %80 : vector<8x1xf32>
      %cst_38 = arith.constant 1.000000e+00 : f32
      %82 = vector.broadcast %cst_38 : f32 to vector<8x1xf32>
      %83 = arith.addf %82, %81 : vector<8x1xf32>
      %84 = math.log %83 : vector<8x1xf32>
      %85 = vector.shape_cast %84 : vector<8x1xf32> to vector<1x8x1xf32>
      %cst_39 = arith.constant dense<0.000000e+00> : vector<1xf32>
      %86 = vector.multi_reduction <add>, %85, %cst_39 [1, 2] : vector<1x8x1xf32> to vector<1xf32>
      %87 = vector.shape_cast %86 : vector<1xf32> to vector<1x1x1xf32>
      %88 = vector.extract %87[0, 0, 0] : f32 from vector<1x1x1xf32>
      %c0_i32_40 = arith.constant 0 : i32
      %89 = vector.broadcast %c0_i32_40 : i32 to vector<8x128xi32>
      %90 = arith.cmpi eq, %45, %89 : vector<8x128xi32>
      %c3_i32 = arith.constant 3 : i32
      %91 = vector.broadcast %c3_i32 : i32 to vector<8x128xi32>
      %92 = arith.cmpi eq, %44, %91 : vector<8x128xi32>
      %93 = arith.andi %90, %92 : vector<8x128xi1>
      %cst_41 = arith.constant 0.000000e+00 : f32
      %94 = vector.broadcast %88 : f32 to vector<8x128xf32>
      %95 = vector.broadcast %cst_41 : f32 to vector<8x128xf32>
      %96 = arith.select %93, %94, %95 : vector<8x128xi1>, vector<8x128xf32>
      %97 = arith.addf %62, %96 : vector<8x128xf32>
      %c0_42 = arith.constant 0 : index
      %c0_43 = arith.constant 0 : index
      %98 = vector.load %arg9[%c0_42, %c0_43] : memref<8x128xf32, #tpu.memory_space<vmem>>, vector<8x128xf32>
      tpu.vector_store %arg9[%c0_42, %c0_43], %97 {strides = array<i32>} : memref<8x128xf32, #tpu.memory_space<vmem>>, vector<8x128xf32>,
    } else {
    }
    %c0_i32_27 = arith.constant 0 : i32
    %66 = arith.cmpi sgt, %arg1, %c0_i32_27 : i32
    %67 = arith.extui %66 : i1 to i32
    %c0_i32_28 = arith.constant 0 : i32
    %68 = arith.cmpi ne, %67, %c0_i32_28 : i32
    scf.if %68 {
      %c0_29 = arith.constant 0 : index
      %c0_30 = arith.constant 0 : index
      %69 = vector.load %arg9[%c0_29, %c0_30] : memref<8x128xf32, #tpu.memory_space<vmem>>, vector<8x128xf32>
      %70 = arith.addf %69, %62 : vector<8x128xf32>
      %c0_31 = arith.constant 0 : index
      %c0_32 = arith.constant 0 : index
      %71 = vector.load %arg9[%c0_31, %c0_32] : memref<8x128xf32, #tpu.memory_space<vmem>>, vector<8x128xf32>
      tpu.vector_store %arg9[%c0_31, %c0_32], %70 {strides = array<i32>} : memref<8x128xf32, #tpu.memory_space<vmem>>, vector<8x128xf32>,
    } else {
    }
    return
  }
  func.func @transform_0(%arg0: i32, %arg1: i32) -> (i32, i32) {
    %c0_i32 = arith.constant 0 : i32
    %c0_i32_0 = arith.constant 0 : i32
    return %arg0, %c0_i32 : i32, i32
  }
  func.func @transform_1(%arg0: i32, %arg1: i32) -> (i32, i32) {
    %c0_i32 = arith.constant 0 : i32
    %c0_i32_0 = arith.constant 0 : i32
    return %arg0, %c0_i32 : i32, i32
  }
  func.func @transform_2(%arg0: i32, %arg1: i32) -> (i32, i32) {
    %c0_i32 = arith.constant 0 : i32
    %c0_i32_0 = arith.constant 0 : i32
    return %arg0, %c0_i32 : i32, i32
  }
  func.func @transform_3(%arg0: i32, %arg1: i32) -> (i32, i32) {
    %c0_i32 = arith.constant 0 : i32
    %c0_i32_0 = arith.constant 0 : i32
    return %arg0, %c0_i32 : i32, i32
  }
  func.func @transform_4(%arg0: i32, %arg1: i32) -> (i32, i32) {
    %c0_i32 = arith.constant 0 : i32
    %c0_i32_0 = arith.constant 0 : i32
    return %arg1, %c0_i32 : i32, i32
  }
  func.func @transform_5(%arg0: i32, %arg1: i32) -> (i32, i32) {
    %c0_i32 = arith.constant 0 : i32
    %c0_i32_0 = arith.constant 0 : i32
    return %arg1, %c0_i32 : i32, i32
  }
  func.func @transform_6(%arg0: i32, %arg1: i32) -> (i32, i32) {
    %c0_i32 = arith.constant 0 : i32
    %c0_i32_0 = arith.constant 0 : i32
    return %c0_i32, %arg1 : i32, i32
  }
  func.func @transform_7(%arg0: i32, %arg1: i32) -> (i32, i32) {
    %c0_i32 = arith.constant 0 : i32
    %c0_i32_0 = arith.constant 0 : i32
    return %arg0, %c0_i32 : i32, i32
  }
}

</mosaic_0001>

<llo_original>
// kernel: tpu_custom_call.1
$region0: #{tpu_custom_call.1}
  #allocation0 [shape = 'u32[]', space=smem, size = 0x4, offset = 0x4, fixed_abs, tag = 'smem constant byte address 0x4 - core index']
  #allocation1 [shape = 'u32[144,128]{1,0:T(1,128)}', space=vmem, size = 0x12000, scoped, tag = 'internal scratch']
  %s0 = inlined_call_operand.vmem [shape: bf16[8,32], index: 0, kind: input, shape index: {}]
  %s1 = inlined_call_operand.vmem [shape: bf16[8,8], index: 1, kind: input, shape index: {}]
  %s2 = inlined_call_operand.vmem [shape: f32[8,1], index: 2, kind: input, shape index: {}]
  %s3 = inlined_call_operand.vmem [shape: f32[8,1], index: 3, kind: input, shape index: {}]
  %s4 = inlined_call_operand.vmem [shape: bf16[8,32], index: 4, kind: input, shape index: {}]
  %s5 = inlined_call_operand.vmem [shape: bf16[8,8], index: 5, kind: input, shape index: {}]
  %s6 = inlined_call_operand.vmem [shape: f32[1,8], index: 6, kind: input, shape index: {}]
  %s7 = inlined_call_operand.hbm [shape: f32[8,128], index: 7, kind: output, shape index: {}]
  %s8 = sld [smem:[#allocation0]]
  $region46: #{tpu_custom_call.1} parent=0
    _
  %s10 = ssub.s32 1, %s8
  %s11 = scalar_select 0, %s10, %s8
  $region1: #{tpu_custom_call.1} parent=0
    #allocation2 [shape = 'u8[4096]{0}', space=vmem, size = 0x1000, scoped, tag = 'output window, operand 0, single buffered']
    #allocation3 [shape = 's32[1]{0}', space=sflag, size = 0x4, scoped, tag = 'scoped memory for tpu_custom_call.1']
    %12 = vsyncpa [#allocation3], 0
    // Predicated region
    $region2: #{tpu_custom_call.1} parent=1 // pred_check
      _
    $region3: #{tpu_custom_call.1} parent=1 // pred_check_branch
      %14 = sbr.rel (0) target = $region5
    $region4: #{tpu_custom_call.1} parent=1 // pred_region
      _
    $region5: #{tpu_custom_call.1} parent=1 // pred_fallthru
      _
    // Predicated region
    $region6: #{tpu_custom_call.1} parent=1 // pred_check
      _
    $region7: #{tpu_custom_call.1} parent=1 // pred_check_branch
      %16 = sbr.rel (0) target = $region9
    $region8: #{tpu_custom_call.1} parent=1 // pred_region
      _
    $region9: #{tpu_custom_call.1} parent=1 // pred_fallthru
      _
    // Predicated region
    $region10: #{tpu_custom_call.1} parent=1 // pred_check
      _
    $region11: #{tpu_custom_call.1} parent=1 // pred_check_branch
      %18 = sbr.rel (0) target = $region13
    $region12: #{tpu_custom_call.1} parent=1 // pred_region
      _
    $region13: #{tpu_custom_call.1} parent=1 // pred_fallthru
      _
    // Predicated region
    $region14: #{tpu_custom_call.1} parent=1 // pred_check
      _
    $region15: #{tpu_custom_call.1} parent=1 // pred_check_branch
      %20 = sbr.rel (0) target = $region17
    $region16: #{tpu_custom_call.1} parent=1 // pred_region
      _
    $region17: #{tpu_custom_call.1} parent=1 // pred_fallthru
      _
    // Predicated region
    $region18: #{tpu_custom_call.1} parent=1 // pred_check
      _
    $region19: #{tpu_custom_call.1} parent=1 // pred_check_branch
      %22 = sbr.rel (0) target = $region21
    $region20: #{tpu_custom_call.1} parent=1 // pred_region
      _
    $region21: #{tpu_custom_call.1} parent=1 // pred_fallthru
      _
    // Predicated region
    $region22: #{tpu_custom_call.1} parent=1 // pred_check
      _
    $region23: #{tpu_custom_call.1} parent=1 // pred_check_branch
      %24 = sbr.rel (0) target = $region25
    $region24: #{tpu_custom_call.1} parent=1 // pred_region
      _
    $region25: #{tpu_custom_call.1} parent=1 // pred_fallthru
      _
    // Predicated region
    $region26: #{tpu_custom_call.1} parent=1 // pred_check
      _
    $region27: #{tpu_custom_call.1} parent=1 // pred_check_branch
      %26 = sbr.rel (0) target = $region29
    $region28: #{tpu_custom_call.1} parent=1 // pred_region
      _
    $region29: #{tpu_custom_call.1} parent=1 // pred_fallthru
      _
    %v28 = vld [vmem:[%s1] sm:$0xf]
    %v29 = vld [vmem:[%s5] sm:$0xf]
    %vm30 = vcmask 64512
    %v32 = vsel %vm30, %v28, 0
    %v35 = vsel %vm30, %v29, 0
    %37 = vmatprep.subr.bf16.mxu0 0
    %38 = vmatpush1.bf16.xpose.msra.mxu0 0
    %39 = vmatprep.subr.bf16.mxu0 0
    %40 = vmatpush1.bf16.xpose.msra.mxu0 0
    %41 = vmatprep.subr.bf16.mxu0 0
    %42 = vmatpush1.bf16.xpose.msra.mxu0 0
    %43 = vmatprep.subr.bf16.mxu0 0
    %44 = vmatpush1.bf16.xpose.msra.mxu0 0
    %45 = vmatprep.subr.bf16.mxu0 0
    %46 = vmatpush1.bf16.xpose.msra.mxu0 0
    %47 = vmatprep.subr.bf16.mxu0 0
    %48 = vmatpush1.bf16.xpose.msra.mxu0 0
    %49 = vmatprep.subr.bf16.mxu0 0
    %50 = vmatpush1.bf16.xpose.msra.mxu0 0
    %51 = vmatprep.subr.bf16.mxu0 0
    %52 = vmatpush1.bf16.xpose.msra.mxu0 %v35
    %53 = vmatprep.subr.bf16.mxu0 0
    %54 = vmatpush2.bf16.xpose.msra.mxu0 0
    %55 = vmatprep.subr.bf16.mxu0 0
    %56 = vmatpush2.bf16.xpose.msra.mxu0 0
    %57 = vmatprep.subr.bf16.mxu0 0
    %58 = vmatpush2.bf16.xpose.msra.mxu0 0
    %59 = vmatprep.subr.bf16.mxu0 0
    %60 = vmatpush2.bf16.xpose.msra.mxu0 0
    %61 = vmatprep.subr.bf16.mxu0 0
    %62 = vmatpush2.bf16.xpose.msra.mxu0 0
    %63 = vmatprep.subr.bf16.mxu0 0
    %64 = vmatpush2.bf16.xpose.msra.mxu0 0
    %65 = vmatprep.subr.bf16.mxu0 0
    %66 = vmatpush2.bf16.xpose.msra.mxu0 0
    %67 = vmatprep.subr.bf16.mxu0 0
    %68 = vmatpush2.bf16.xpose.msra.mxu0 0
    %69 = vmatprep.mubr.bf16.mxu0 0
    %70 = vmatmul.mubr.bf16.gmra.mxu0 %v32
    %v71 = vpop.f32.mrf.mxu0
    %v72 = vadd.f32 0.0, %v71
    %v73 = vpop.f32.mrf.mxu0
    %v74 = vpop.f32.mrf.mxu0
    %v75 = vpop.f32.mrf.mxu0
    %76 = vdwg.mxu0
    %vm77 = vcmp.gt.f32.partialorder %v72, 0.0
    %v78 = vsel %vm77, 1, 0
    %v79 = vcvt.s32.f32 %v78
    %v80 = vld [vmem:[%s0] sm:$0xf]
    %v81 = vld [vmem:[%s4] sm:$0xf]
    %vm82 = vcmask 261120
    %v84 = vsel %vm82, %v80, 0
    %v87 = vsel %vm82, %v81, 0
    %89 = vmatprep.subr.bf16.mxu0 0
    %90 = vmatpush1.bf16.xpose.msra.mxu0 0
    %91 = vmatprep.subr.bf16.mxu0 0
    %92 = vmatpush1.bf16.xpose.msra.mxu0 0
    %93 = vmatprep.subr.bf16.mxu0 0
    %94 = vmatpush1.bf16.xpose.msra.mxu0 0
    %95 = vmatprep.subr.bf16.mxu0 0
    %96 = vmatpush1.bf16.xpose.msra.mxu0 0
    %97 = vmatprep.subr.bf16.mxu0 0
    %98 = vmatpush1.bf16.xpose.msra.mxu0 0
    %99 = vmatprep.subr.bf16.mxu0 0
    %100 = vmatpush1.bf16.xpose.msra.mxu0 0
    %101 = vmatprep.subr.bf16.mxu0 0
    %102 = vmatpush1.bf16.xpose.msra.mxu0 0
    %103 = vmatprep.subr.bf16.mxu0 0
    %104 = vmatpush1.bf16.xpose.msra.mxu0 %v87
    %105 = vmatprep.subr.bf16.mxu0 0
    %106 = vmatpush2.bf16.xpose.msra.mxu0 0
    %107 = vmatprep.subr.bf16.mxu0 0
    %108 = vmatpush2.bf16.xpose.msra.mxu0 0
    %109 = vmatprep.subr.bf16.mxu0 0
    %110 = vmatpush2.bf16.xpose.msra.mxu0 0
    %111 = vmatprep.subr.bf16.mxu0 0
    %112 = vmatpush2.bf16.xpose.msra.mxu0 0
    %113 = vmatprep.subr.bf16.mxu0 0
    %114 = vmatpush2.bf16.xpose.msra.mxu0 0
    %115 = vmatprep.subr.bf16.mxu0 0
    %116 = vmatpush2.bf16.xpose.msra.mxu0 0
    %117 = vmatprep.subr.bf16.mxu0 0
    %118 = vmatpush2.bf16.xpose.msra.mxu0 0
    %119 = vmatprep.subr.bf16.mxu0 0
    %120 = vmatpush2.bf16.xpose.msra.mxu0 0
    %121 = vmatprep.mubr.bf16.mxu0 0
    %122 = vmatmul.mubr.bf16.gmra.mxu0 %v84
    %v123 = vpop.f32.mrf.mxu0
    %v124 = vadd.f32 0.0, %v123
    %v125 = vpop.f32.mrf.mxu0
    %v126 = vpop.f32.mrf.mxu0
    %v127 = vpop.f32.mrf.mxu0
    %128 = vdwg.mxu0
    %v129 = vld [vmem:[%s2] sm:$0xff]
    %v130 = vld [vmem:[%s6] sm:$0x1]
    %132 = vset.pattern.permute.xlu0 0
    %133 = vperm.xlu0 %132, %v129
    %v134 = vpop.permute.xlu0 %133
    %v137 = vlaneseq
    %v138 = vshrl.u32 %v137, 7
    %v139 = vsub.s32 0, %v138
    %v140 = vrot.slane %v130, %v139
    %v142 = vmul.f32 %v134, %v140
    %v143 = vmul.f32 %v124, %v142
    %v144 = vmin.f32 %v143, 0.99
    %v145 = vsub.f32 1.0, %v144
    %v146 = vmul.f32 %v145, 16.0
    %vm147 = vcmp.gt.f32.partialorder %v79, 0.5
    %v148 = vrcp.pop %v146
    %v149 = vsel %vm147, 0.05, %v148
    %v150 = vadd.f32 %v146, 20.0
    %v151 = vmul.f32 %v150, %v149
    %v152 = vlog2.pop %v151
    %v153 = vmul.f32 %v152, 0.6931472
    %v154 = vsel %vm30, %v79, 0.0
    %155 = vadd.xlane.f32.xlu0 %v154
    %v156 = vpop.xlane.xlu0 %155
    %v157 = vrot.slane %v156, 4
    %v158 = vadd.f32 %v156, %v157
    %v159 = vrot.slane %v158, 2
    %v160 = vadd.f32 %v158, %v159
    %v161 = vrot.slane %v160, 1
    %v162 = vadd.f32 %v160, %v161
    %s163 = vtos %v162
    %v164 = vmul.f32 %v79, %v153
    %v165 = vsel %vm30, %v164, 0.0
    %166 = vadd.xlane.f32.xlu0 %v165
    %v167 = vpop.xlane.xlu0 %166
    %v168 = vrot.slane %v167, 4
    %v169 = vadd.f32 %v167, %v168
    %v170 = vrot.slane %v169, 2
    %v171 = vadd.f32 %v169, %v170
    %v172 = vrot.slane %v171, 1
    %v173 = vadd.f32 %v171, %v172
    %s174 = vtos %v173
    %v175 = vsel %vm30, %v153, 0.0
    %176 = vadd.xlane.f32.xlu0 %v175
    %v177 = vpop.xlane.xlu0 %176
    %v178 = vrot.slane %v177, 4
    %v179 = vadd.f32 %v177, %v178
    %v180 = vrot.slane %v179, 2
    %v181 = vadd.f32 %v179, %v180
    %v182 = vrot.slane %v181, 1
    %v183 = vadd.f32 %v181, %v182
    %s184 = vtos %v183
    %v185 = vlaneseq
    %v186 = vand.u32 %v185, 127
    %v187 = vlaneseq
    %v188 = vshrl.u32 %v187, 7
    %vm189 = vcmp.eq.s32.totalorder %v186, 0
    %vm190 = vcmp.eq.s32.totalorder %v186, 1
    %vm191 = vcmp.eq.s32.totalorder %v186, 2
    %v192 = vstv %s184
    %v193 = vsel %vm191, %v192, 0.0
    %v194 = vstv %s174
    %v195 = vsel %vm190, %v194, %v193
    %v196 = vstv %s163
    %v197 = vsel %vm189, %v196, %v195
    %vm198 = vcmp.eq.s32.totalorder %v188, 0
    %v199 = vsel %vm198, %v197, 0.0
    %p200 = scmp.eq.s32.totalorder 0, 0
    // Predicated region
    $region30: #{tpu_custom_call.1} parent=1 // pred_check
      %p201 = pneg %p200
    $region31: #{tpu_custom_call.1} parent=1 // pred_check_branch
      %203 = sbr.rel (%p201) target = $region33
    $region32: #{tpu_custom_call.1} parent=1 // pred_region
      %v204 = vld [vmem:[%s3] sm:$0xff]
      %v205 = vld [vmem:[%s2] sm:$0xff]
      %v206 = vmul.f32 %v204, %v205
      %v207 = vmul.f32 %v206, 0.17677669
      %v208 = vmin.f32 %v207, 0.99
      %v209 = vsub.f32 1.0, %v208
      %v210 = vmul.f32 %v209, 16.0
      %v211 = vmul.f32 %v210, 0.05
      %v212 = vadd.f32 %v211, 1.0
      %v213 = vlog2.pop %v212
      %v214 = vmul.f32 %v213, 0.6931472
      %vm215 = vcmask 7168
      %v216 = vsel %vm215, %v214, 0.0
      %217 = vadd.xlane.f32.xlu0 %v216
      %v218 = vpop.xlane.xlu0 %217
      %v219 = vrot.slane %v218, 4
      %v220 = vadd.f32 %v218, %v219
      %v221 = vrot.slane %v220, 2
      %v222 = vadd.f32 %v220, %v221
      %v223 = vrot.slane %v222, 1
      %v224 = vadd.f32 %v222, %v223
      %s225 = vtos %v224
      %vm226 = vcmp.eq.s32.totalorder %v186, 3
      %vm227 = vmand %vm198, %vm226
      %v228 = vstv %s225
      %v229 = vsel %vm227, %v228, 0.0
      %v230 = vadd.f32 %v199, %v229
      %231 = vst [vmem:[#allocation2] sm:$0xff] %v230
    $region33: #{tpu_custom_call.1} parent=1 // pred_fallthru
      _
    %p232 = scmp.gt.s32.totalorder 0, 0
    // Predicated region
    $region34: #{tpu_custom_call.1} parent=1 // pred_check
      %p233 = pneg %p232
    $region35: #{tpu_custom_call.1} parent=1 // pred_check_branch
      %235 = sbr.rel (%p233) target = $region37
    $region36: #{tpu_custom_call.1} parent=1 // pred_region
      %v236 = vld [vmem:[#allocation2] sm:$0xff]
      %v237 = vadd.f32 %v236, %v199
      %238 = vst [vmem:[#allocation2] sm:$0xff] %v237
    $region37: #{tpu_custom_call.1} parent=1 // pred_fallthru
      _
    // Predicated region
    $region38: #{tpu_custom_call.1} parent=1 // pred_check
      _
    $region39: #{tpu_custom_call.1} parent=1 // pred_check_branch
      %240 = sbr.rel (0) target = $region41
    $region40: #{tpu_custom_call.1} parent=1 // pred_region
      %s242 = ssub.s32 128, 128
      %243 = vsyncadd [#allocation3], %s242
      %s245 = sshll.u32 [#allocation2], 4
      %s246 = int_to_ptr.vmem [resolvable:$true] %s245
      %248 = dma.vmem_to_hbm [thread:$0]  %s246, 128, %s7, [#allocation3]
    $region41: #{tpu_custom_call.1} parent=1 // pred_fallthru
      _
    // Predicated region
    $region42: #{tpu_custom_call.1} parent=1 // pred_check
      _
    $region43: #{tpu_custom_call.1} parent=1 // pred_check_branch
      %250 = sbr.rel (0) target = $region45
    $region44: #{tpu_custom_call.1} parent=1 // pred_region
      %251 = dma.done [#allocation3], 128
    $region45: #{tpu_custom_call.1} parent=1 // pred_fallthru
      _
    %252 = vsyncpa [#allocation3], 1

</llo_original>
